<compile_context>
chip_gen: v6e
topology: v6e:2x2x1
jax: 0.10.0
libtpu: 0.0.40
codegen_flags: <defaults>
</compile_context>

<pallas_src>
import functools

import jax
import jax.numpy as jnp
from jax.experimental import pallas as pl
from jax.experimental.pallas import tpu as pltpu


# ----------------------------------------------------------------------------
# Fused kernel: one invocation processes the whole batch.
# ----------------------------------------------------------------------------
def _d_gen_fused_kernel(x_ref, wc_ref, bc_ref, we_ref, be_ref, wd_ref, bd_ref,
                        o_ref, *, batch, hw):
    # x_ref : (B*HW, 9*Cin)   im2col patches (tap-major columns)
    # wc_ref: (9*Cin, Cconv)  stacked 3x3 conv weight
    # bc_ref: (1, Cconv)
    # we_ref: (Cconv, hidden) encoder FC
    # be_ref: (1, hidden)
    # wd_ref: (hidden, OUT_W) fused decoder weight [w_dim | w_mask | zero-pad]
    # bd_ref: (1, OUT_W)
    # o_ref : (B, OUT_W)      [dim(3) | sigmoid mask(HW) | pad]

    # --- Conv 3x3 "same" + ReLU as ONE MXU dot over the im2col slab.
    conv = jnp.maximum(
        jnp.dot(x_ref[...], wc_ref[...], preferred_element_type=jnp.float32)
        + bc_ref[...], 0.0)                                     # (B*HW, Cconv)

    # --- Global average pool for all batch elems: block-diagonal (B, B*HW)
    #     pooling matrix (1/HW on own rows) built on the VPU, one MXU dot.
    bhw = conv.shape[0]
    row = jax.lax.broadcasted_iota(jnp.int32, (batch, bhw), 0)
    col = jax.lax.broadcasted_iota(jnp.int32, (batch, bhw), 1)
    in_block = (col >= row * hw) & (col < (row + 1) * hw)
    pool = jnp.where(in_block, 1.0 / hw, 0.0)
    pooled = jnp.dot(pool, conv, preferred_element_type=jnp.float32)  # (B,Cconv)

    # --- Encoder FC + ReLU -> latent "shape" vector (M = B rows).
    latent = jnp.maximum(
        jnp.dot(pooled, we_ref[...], preferred_element_type=jnp.float32)
        + be_ref[...], 0.0)                                     # (B, hidden)

    # --- Decoder: single lane-dense matmul for both heads; sigmoid only on
    #     mask lanes (lane >= 3). Pad lanes discarded in the wrapper.
    logits = (jnp.dot(latent, wd_ref[...], preferred_element_type=jnp.float32)
              + bd_ref[...])                                    # (B, OUT_W)
    lane = jax.lax.broadcasted_iota(jnp.int32, logits.shape, 1)
    o_ref[...] = jnp.where(lane < 3, logits, jax.nn.sigmoid(logits))


# ----------------------------------------------------------------------------
# Parameters (PyTorch-equivalent layout notes in comments)
# ----------------------------------------------------------------------------
def init_params(cin=4, cconv=16, hidden=32, hw=16 * 16, seed=0):
    k = jax.random.PRNGKey(seed)
    ks = jax.random.split(k, 4)
    # Conv weight is tap-major (kh*kw, Cin, Cout).  A real PyTorch Conv2d
    # weight (Cout, Cin, kh, kw) maps via transpose(2, 3, 1, 0).reshape(9, Cin, Cout).
    return {
        "w_conv": jax.random.normal(ks[0], (9, cin, cconv), jnp.float32) * 0.1,
        "b_conv": jnp.zeros((1, cconv), jnp.float32),
        "w_enc": jax.random.normal(ks[1], (cconv, hidden), jnp.float32) * 0.1,
        "b_enc": jnp.zeros((1, hidden), jnp.float32),
        "w_dim": jax.random.normal(ks[2], (hidden, 3), jnp.float32) * 0.1,
        "b_dim": jnp.zeros((1, 3), jnp.float32),
        "w_mask": jax.random.normal(ks[3], (hidden, hw), jnp.float32) * 0.1,
        "b_mask": jnp.zeros((1, hw), jnp.float32),
    }


# ----------------------------------------------------------------------------
# Forward wrapper: NCHW in, (dim, mask) out — semantics of d_gen.forward.
# ----------------------------------------------------------------------------
@jax.jit
def d_gen_forward(image_nchw, params):
    b, cin, h, w = image_nchw.shape
    hw = h * w
    cconv = params["w_conv"].shape[2]
    hidden = params["w_enc"].shape[1]
    out_w = ((3 + hw + 127) // 128) * 128           # lane-dense output width

    # NCHW -> NHWC, zero-pad halo, build the (B*HW, 9*Cin) im2col slab once.
    # At these sizes (~73 KB) this is cheaper than 9 in-kernel relayouts.
    # TODO(synk): at production H*W do this in VMEM via DMA instead of HBM.
    x = jnp.transpose(image_nchw, (0, 2, 3, 1))
    x_pad = jnp.pad(x, ((0, 0), (1, 1), (1, 1), (0, 0)))
    taps = [x_pad[:, dh:dh + h, dw:dw + w, :]
            for dh in range(3) for dw in range(3)]
    im2col = jnp.concatenate(taps, axis=-1).reshape(b * hw, 9 * cin)

    # Stack conv weight tap-major -> (9*Cin, Cconv); fuse decoder heads into
    # one lane-dense weight/bias slab.
    w_conv = params["w_conv"].reshape(9 * cin, cconv)
    w_dec = jnp.pad(
        jnp.concatenate([params["w_dim"], params["w_mask"]], axis=1),
        ((0, 0), (0, out_w - (3 + hw))))
    b_dec = jnp.pad(
        jnp.concatenate([params["b_dim"], params["b_mask"]], axis=1),
        ((0, 0), (0, out_w - (3 + hw))))

    flops = (2 * b * hw * 9 * cin * cconv       # conv dot
             + 2 * b * (b * hw) * cconv         # pooling dot
             + 2 * b * cconv * hidden           # encoder FC
             + 2 * b * hidden * out_w)          # decoder
    bytes_accessed = 4 * (im2col.size + w_conv.size + cconv
                          + cconv * hidden + hidden
                          + hidden * out_w + out_w + b * out_w)

    vmem_spec = pl.BlockSpec(memory_space=pltpu.MemorySpace.VMEM)
    out = pl.pallas_call(
        functools.partial(_d_gen_fused_kernel, batch=b, hw=hw),
        out_shape=jax.ShapeDtypeStruct((b, out_w), jnp.float32),
        in_specs=[vmem_spec] * 7,
        out_specs=vmem_spec,
        compiler_params=pltpu.CompilerParams(
            vmem_limit_bytes=32 * 1024 * 1024),
        cost_estimate=pl.CostEstimate(
            flops=flops, transcendentals=b * out_w,
            bytes_accessed=bytes_accessed),
    )(im2col, w_conv, params["b_conv"],
      params["w_enc"], params["b_enc"], w_dec, b_dec)

    dim = out[:, :3]
    mask = out[:, 3:3 + hw].reshape(b, 1, h, w)
    return dim, mask


if __name__ == "__main__":
    B, C, H, W = 2, 4, 16, 16
    key = jax.random.PRNGKey(0)
    image = jax.random.normal(key, (B, C, H, W), jnp.float32)

    params = init_params(cin=C, cconv=16, hidden=32, hw=H * W, seed=0)

    dim, mask = d_gen_forward(image, params)
    jax.block_until_ready((dim, mask))

    # Pure-JAX reference for numerical validation.
    def ref_forward(img, p):
        xr = jnp.transpose(img, (0, 2, 3, 1))
        xp = jnp.pad(xr, ((0, 0), (1, 1), (1, 1), (0, 0)))
        acc = jnp.zeros((B, H, W, p["w_conv"].shape[2]), jnp.float32)
        for tap in range(9):
            dh, dw = tap // 3, tap % 3
            acc = acc + jnp.einsum("bhwc,cf->bhwf",
                                   xp[:, dh:dh + H, dw:dw + W, :],
                                   p["w_conv"][tap])
        conv = jnp.maximum(acc + p["b_conv"][0], 0.0)
        pooled = conv.mean(axis=(1, 2))
        lat = jnp.maximum(pooled @ p["w_enc"] + p["b_enc"], 0.0)
        d = lat @ p["w_dim"] + p["b_dim"]
        m = jax.nn.sigmoid(lat @ p["w_mask"] + p["b_mask"]).reshape(B, 1, H, W)
        return d, m

    d_ref, m_ref = ref_forward(image, params)

    assert dim.shape == (B, 3) and dim.dtype == jnp.float32
    assert mask.shape == (B, 1, H, W) and mask.dtype == jnp.float32
    assert bool(jnp.all(jnp.isfinite(dim))) and bool(jnp.all(jnp.isfinite(mask)))
    assert bool(jnp.all((mask >= 0.0) & (mask <= 1.0)))
    assert bool(jnp.allclose(dim, d_ref, atol=2e-2, rtol=2e-2))
    assert bool(jnp.allclose(mask, m_ref, atol=2e-2, rtol=2e-2))
    print("KERNEL_OK")
</pallas_src>

<mosaic_0001>
module attributes {stable_mosaic.version = 11 : i64} {
  func.func @_d_gen_fused_kernel(%arg0: memref<512x36xf32, #tpu.memory_space<vmem>>, %arg1: memref<36x16xf32, #tpu.memory_space<vmem>>, %arg2: memref<1x16xf32, #tpu.memory_space<vmem>>, %arg3: memref<16x32xf32, #tpu.memory_space<vmem>>, %arg4: memref<1x32xf32, #tpu.memory_space<vmem>>, %arg5: memref<32x384xf32, #tpu.memory_space<vmem>>, %arg6: memref<1x384xf32, #tpu.memory_space<vmem>>, %arg7: memref<2x384xf32, #tpu.memory_space<vmem>>) attributes {dimension_semantics = [], scalar_prefetch = 0 : i64, scratch_operands = 0 : i64, tpu.core_type = #tpu.core_type<tc>} {
    %c0 = arith.constant 0 : index
    %c0_0 = arith.constant 0 : index
    %0 = vector.load %arg0[%c0, %c0_0] : memref<512x36xf32, #tpu.memory_space<vmem>>, vector<512x36xf32>
    %c0_1 = arith.constant 0 : index
    %c0_2 = arith.constant 0 : index
    %1 = vector.load %arg1[%c0_1, %c0_2] : memref<36x16xf32, #tpu.memory_space<vmem>>, vector<36x16xf32>
    %cst = arith.constant dense<0.000000e+00> : vector<512x16xf32>
    %2 = tpu.matmul %0, %1, %cst {dimension_numbers = #tpu.dot_dimension_numbers<[1], [0], [0], [1], [0, 0, 1, 1], [], []>} : vector<512x36xf32>, vector<36x16xf32>, vector<512x16xf32> -> vector<512x16xf32>
    %c0_3 = arith.constant 0 : index
    %c0_4 = arith.constant 0 : index
    %3 = vector.load %arg2[%c0_3, %c0_4] : memref<1x16xf32, #tpu.memory_space<vmem>>, vector<1x16xf32>
    %4 = vector.broadcast %3 : vector<1x16xf32> to vector<512x16xf32>
    %5 = arith.addf %2, %4 : vector<512x16xf32>
    %cst_5 = arith.constant 0.000000e+00 : f32
    %6 = vector.broadcast %cst_5 : f32 to vector<512x16xf32>
    %7 = arith.maximumf %5, %6 : vector<512x16xf32>
    %8 = tpu.iota {dimensions = array<i32: 0>} : vector<2x512xi32>
    %9 = tpu.iota {dimensions = array<i32: 1>} : vector<2x512xi32>
    %c256_i32 = arith.constant 256 : i32
    %10 = vector.broadcast %c256_i32 : i32 to vector<2x512xi32>
    %11 = arith.muli %8, %10 : vector<2x512xi32>
    %12 = arith.cmpi sge, %9, %11 : vector<2x512xi32>
    %c1_i32 = arith.constant 1 : i32
    %13 = vector.broadcast %c1_i32 : i32 to vector<2x512xi32>
    %14 = arith.addi %8, %13 : vector<2x512xi32>
    %c256_i32_6 = arith.constant 256 : i32
    %15 = vector.broadcast %c256_i32_6 : i32 to vector<2x512xi32>
    %16 = arith.muli %14, %15 : vector<2x512xi32>
    %17 = arith.cmpi slt, %9, %16 : vector<2x512xi32>
    %18 = arith.andi %12, %17 : vector<2x512xi1>
    %cst_7 = arith.constant 3.906250e-03 : f32
    %cst_8 = arith.constant 0.000000e+00 : f32
    %19 = vector.broadcast %cst_7 : f32 to vector<2x512xf32>
    %20 = vector.broadcast %cst_8 : f32 to vector<2x512xf32>
    %21 = arith.select %18, %19, %20 : vector<2x512xi1>, vector<2x512xf32>
    %cst_9 = arith.constant dense<0.000000e+00> : vector<2x16xf32>
    %22 = tpu.matmul %21, %7, %cst_9 {dimension_numbers = #tpu.dot_dimension_numbers<[1], [0], [0], [1], [0, 0, 1, 1], [], []>} : vector<2x512xf32>, vector<512x16xf32>, vector<2x16xf32> -> vector<2x16xf32>
    %c0_10 = arith.constant 0 : index
    %c0_11 = arith.constant 0 : index
    %23 = vector.load %arg3[%c0_10, %c0_11] : memref<16x32xf32, #tpu.memory_space<vmem>>, vector<16x32xf32>
    %cst_12 = arith.constant dense<0.000000e+00> : vector<2x32xf32>
    %24 = tpu.matmul %22, %23, %cst_12 {dimension_numbers = #tpu.dot_dimension_numbers<[1], [0], [0], [1], [0, 0, 1, 1], [], []>} : vector<2x16xf32>, vector<16x32xf32>, vector<2x32xf32> -> vector<2x32xf32>
    %c0_13 = arith.constant 0 : index
    %c0_14 = arith.constant 0 : index
    %25 = vector.load %arg4[%c0_13, %c0_14] : memref<1x32xf32, #tpu.memory_space<vmem>>, vector<1x32xf32>
    %26 = vector.broadcast %25 : vector<1x32xf32> to vector<2x32xf32>
    %27 = arith.addf %24, %26 : vector<2x32xf32>
    %cst_15 = arith.constant 0.000000e+00 : f32
    %28 = vector.broadcast %cst_15 : f32 to vector<2x32xf32>
    %29 = arith.maximumf %27, %28 : vector<2x32xf32>
    %c0_16 = arith.constant 0 : index
    %c0_17 = arith.constant 0 : index
    %30 = vector.load %arg5[%c0_16, %c0_17] : memref<32x384xf32, #tpu.memory_space<vmem>>, vector<32x384xf32>
    %cst_18 = arith.constant dense<0.000000e+00> : vector<2x384xf32>
    %31 = tpu.matmul %29, %30, %cst_18 {dimension_numbers = #tpu.dot_dimension_numbers<[1], [0], [0], [1], [0, 0, 1, 1], [], []>} : vector<2x32xf32>, vector<32x384xf32>, vector<2x384xf32> -> vector<2x384xf32>
    %c0_19 = arith.constant 0 : index
    %c0_20 = arith.constant 0 : index
    %32 = vector.load %arg6[%c0_19, %c0_20] : memref<1x384xf32, #tpu.memory_space<vmem>>, vector<1x384xf32>
    %33 = vector.broadcast %32 : vector<1x384xf32> to vector<2x384xf32>
    %34 = arith.addf %31, %33 : vector<2x384xf32>
    %35 = tpu.iota {dimensions = array<i32: 1>} : vector<2x384xi32>
    %c3_i32 = arith.constant 3 : i32
    %36 = vector.broadcast %c3_i32 : i32 to vector<2x384xi32>
    %37 = arith.cmpi slt, %35, %36 : vector<2x384xi32>
    %38 = arith.negf %34 : vector<2x384xf32>
    %39 = math.exp %38 : vector<2x384xf32>
    %cst_21 = arith.constant 1.000000e+00 : f32
    %40 = vector.broadcast %cst_21 : f32 to vector<2x384xf32>
    %41 = arith.addf %40, %39 : vector<2x384xf32>
    %42 = arith.divf %40, %41 : vector<2x384xf32>
    %43 = arith.select %37, %34, %42 : vector<2x384xi1>, vector<2x384xf32>
    %c0_22 = arith.constant 0 : index
    %c0_23 = arith.constant 0 : index
    %44 = vector.load %arg7[%c0_22, %c0_23] : memref<2x384xf32, #tpu.memory_space<vmem>>, vector<2x384xf32>
    tpu.vector_store %arg7[%c0_22, %c0_23], %43 {strides = array<i32>} : memref<2x384xf32, #tpu.memory_space<vmem>>, vector<2x384xf32>,
    return
  }
}

</mosaic_0001>

<llo_original>
// kernel: d_gen_forward.1
$region0: #{d_gen_forward.1}
  #allocation0 [shape = 'u32[]', space=smem, size = 0x4, offset = 0x4, fixed_abs, tag = 'smem constant byte address 0x4 - core index']
  #allocation1 [shape = 'u32[144,128]{1,0:T(1,128)}', space=vmem, size = 0x12000, scoped, tag = 'internal scratch']
  %s0 = inlined_call_operand.vmem [shape: f32[512,36], index: 0, kind: input, shape index: {}]
  %s1 = inlined_call_operand.vmem [shape: f32[36,16], index: 1, kind: input, shape index: {}]
  %s2 = inlined_call_operand.vmem [shape: f32[1,16], index: 2, kind: input, shape index: {}]
  %s3 = inlined_call_operand.vmem [shape: f32[16,32], index: 3, kind: input, shape index: {}]
  %s4 = inlined_call_operand.vmem [shape: f32[1,32], index: 4, kind: input, shape index: {}]
  %s5 = inlined_call_operand.vmem [shape: f32[32,384], index: 5, kind: input, shape index: {}]
  %s6 = inlined_call_operand.vmem [shape: f32[1,384], index: 6, kind: input, shape index: {}]
  %s7 = inlined_call_operand.vmem [shape: f32[2,384], index: 7, kind: output, shape index: {}]
  %s8 = sld [smem:[#allocation0]]
  $region38: #{d_gen_forward.1} parent=0
    _
  %s10 = ssub.s32 1, %s8
  %s11 = scalar_select 0, %s10, %s8
  // Predicated region
  $region2: #{d_gen_forward.1} parent=0 // pred_check
    _
  $region3: #{d_gen_forward.1} parent=0 // pred_check_branch
    %13 = sbr.rel (0) target = $region5
  $region4: #{d_gen_forward.1} parent=0 // pred_region
    _
  $region5: #{d_gen_forward.1} parent=0 // pred_fallthru
    _
  // Predicated region
  $region6: #{d_gen_forward.1} parent=0 // pred_check
    _
  $region7: #{d_gen_forward.1} parent=0 // pred_check_branch
    %15 = sbr.rel (0) target = $region9
  $region8: #{d_gen_forward.1} parent=0 // pred_region
    _
  $region9: #{d_gen_forward.1} parent=0 // pred_fallthru
    _
  // Predicated region
  $region10: #{d_gen_forward.1} parent=0 // pred_check
    _
  $region11: #{d_gen_forward.1} parent=0 // pred_check_branch
    %17 = sbr.rel (0) target = $region13
  $region12: #{d_gen_forward.1} parent=0 // pred_region
    _
  $region13: #{d_gen_forward.1} parent=0 // pred_fallthru
    _
  // Predicated region
  $region14: #{d_gen_forward.1} parent=0 // pred_check
    _
  $region15: #{d_gen_forward.1} parent=0 // pred_check_branch
    %19 = sbr.rel (0) target = $region17
  $region16: #{d_gen_forward.1} parent=0 // pred_region
    _
  $region17: #{d_gen_forward.1} parent=0 // pred_fallthru
    _
  // Predicated region
  $region18: #{d_gen_forward.1} parent=0 // pred_check
    _
  $region19: #{d_gen_forward.1} parent=0 // pred_check_branch
    %21 = sbr.rel (0) target = $region21
  $region20: #{d_gen_forward.1} parent=0 // pred_region
    _
  $region21: #{d_gen_forward.1} parent=0 // pred_fallthru
    _
  // Predicated region
  $region22: #{d_gen_forward.1} parent=0 // pred_check
    _
  $region23: #{d_gen_forward.1} parent=0 // pred_check_branch
    %23 = sbr.rel (0) target = $region25
  $region24: #{d_gen_forward.1} parent=0 // pred_region
    _
  $region25: #{d_gen_forward.1} parent=0 // pred_fallthru
    _
  // Predicated region
  $region26: #{d_gen_forward.1} parent=0 // pred_check
    _
  $region27: #{d_gen_forward.1} parent=0 // pred_check_branch
    %25 = sbr.rel (0) target = $region29
  $region28: #{d_gen_forward.1} parent=0 // pred_region
    _
  $region29: #{d_gen_forward.1} parent=0 // pred_fallthru
    _
  %v26 = vld [vmem:[%s0] sm:$0xff]
  %v27 = vld [vmem:[%s0 + $0x8] sm:$0xff]
  %v28 = vld [vmem:[%s0 + $0x10] sm:$0xff]
  %v29 = vld [vmem:[%s0 + $0x18] sm:$0xff]
  %v30 = vld [vmem:[%s0 + $0x20] sm:$0xff]
  %v31 = vld [vmem:[%s0 + $0x28] sm:$0xff]
  %v32 = vld [vmem:[%s0 + $0x30] sm:$0xff]
  %v33 = vld [vmem:[%s0 + $0x38] sm:$0xff]
  %v34 = vld [vmem:[%s0 + $0x40] sm:$0xff]
  %v35 = vld [vmem:[%s0 + $0x48] sm:$0xff]
  %v36 = vld [vmem:[%s0 + $0x50] sm:$0xff]
  %v37 = vld [vmem:[%s0 + $0x58] sm:$0xff]
  %v38 = vld [vmem:[%s0 + $0x60] sm:$0xff]
  %v39 = vld [vmem:[%s0 + $0x68] sm:$0xff]
  %v40 = vld [vmem:[%s0 + $0x70] sm:$0xff]
  %v41 = vld [vmem:[%s0 + $0x78] sm:$0xff]
  %v42 = vld [vmem:[%s0 + $0x80] sm:$0xff]
  %v43 = vld [vmem:[%s0 + $0x88] sm:$0xff]
  %v44 = vld [vmem:[%s0 + $0x90] sm:$0xff]
  %v45 = vld [vmem:[%s0 + $0x98] sm:$0xff]
  %v46 = vld [vmem:[%s0 + $0xa0] sm:$0xff]
  %v47 = vld [vmem:[%s0 + $0xa8] sm:$0xff]
  %v48 = vld [vmem:[%s0 + $0xb0] sm:$0xff]
  %v49 = vld [vmem:[%s0 + $0xb8] sm:$0xff]
  %v50 = vld [vmem:[%s0 + $0xc0] sm:$0xff]
  %v51 = vld [vmem:[%s0 + $0xc8] sm:$0xff]
  %v52 = vld [vmem:[%s0 + $0xd0] sm:$0xff]
  %v53 = vld [vmem:[%s0 + $0xd8] sm:$0xff]
  %v54 = vld [vmem:[%s0 + $0xe0] sm:$0xff]
  %v55 = vld [vmem:[%s0 + $0xe8] sm:$0xff]
  %v56 = vld [vmem:[%s0 + $0xf0] sm:$0xff]
  %v57 = vld [vmem:[%s0 + $0xf8] sm:$0xff]
  %v58 = vld [vmem:[%s0 + $0x100] sm:$0xff]
  %v59 = vld [vmem:[%s0 + $0x108] sm:$0xff]
  %v60 = vld [vmem:[%s0 + $0x110] sm:$0xff]
  %v61 = vld [vmem:[%s0 + $0x118] sm:$0xff]
  %v62 = vld [vmem:[%s0 + $0x120] sm:$0xff]
  %v63 = vld [vmem:[%s0 + $0x128] sm:$0xff]
  %v64 = vld [vmem:[%s0 + $0x130] sm:$0xff]
  %v65 = vld [vmem:[%s0 + $0x138] sm:$0xff]
  %v66 = vld [vmem:[%s0 + $0x140] sm:$0xff]
  %v67 = vld [vmem:[%s0 + $0x148] sm:$0xff]
  %v68 = vld [vmem:[%s0 + $0x150] sm:$0xff]
  %v69 = vld [vmem:[%s0 + $0x158] sm:$0xff]
  %v70 = vld [vmem:[%s0 + $0x160] sm:$0xff]
  %v71 = vld [vmem:[%s0 + $0x168] sm:$0xff]
  %v72 = vld [vmem:[%s0 + $0x170] sm:$0xff]
  %v73 = vld [vmem:[%s0 + $0x178] sm:$0xff]
  %v74 = vld [vmem:[%s0 + $0x180] sm:$0xff]
  %v75 = vld [vmem:[%s0 + $0x188] sm:$0xff]
  %v76 = vld [vmem:[%s0 + $0x190] sm:$0xff]
  %v77 = vld [vmem:[%s0 + $0x198] sm:$0xff]
  %v78 = vld [vmem:[%s0 + $0x1a0] sm:$0xff]
  %v79 = vld [vmem:[%s0 + $0x1a8] sm:$0xff]
  %v80 = vld [vmem:[%s0 + $0x1b0] sm:$0xff]
  %v81 = vld [vmem:[%s0 + $0x1b8] sm:$0xff]
  %v82 = vld [vmem:[%s0 + $0x1c0] sm:$0xff]
  %v83 = vld [vmem:[%s0 + $0x1c8] sm:$0xff]
  %v84 = vld [vmem:[%s0 + $0x1d0] sm:$0xff]
  %v85 = vld [vmem:[%s0 + $0x1d8] sm:$0xff]
  %v86 = vld [vmem:[%s0 + $0x1e0] sm:$0xff]
  %v87 = vld [vmem:[%s0 + $0x1e8] sm:$0xff]
  %v88 = vld [vmem:[%s0 + $0x1f0] sm:$0xff]
  %v89 = vld [vmem:[%s0 + $0x1f8] sm:$0xff]
  %v90 = vld [vmem:[%s1] sm:$0xff]
  %v91 = vld [vmem:[%s1 + $0x8] sm:$0xff]
  %v92 = vld [vmem:[%s1 + $0x10] sm:$0xff]
  %v93 = vld [vmem:[%s1 + $0x18] sm:$0xff]
  %v94 = vld [vmem:[%s1 + $0x20] sm:$0xf]
  %v95 = vld [vmem:[%s2] sm:$0x1]
  %v97 = vlaneseq
  %v98 = vshrl.u32 %v97, 7
  %v99 = vsub.s32 0, %v98
  %v100 = vrot.slane %v95, %v99
  %vm102 = vcmask 293888
  %v104 = vsel %vm102, %v26, 0
  %v107 = vsel %vm102, %v27, 0
  %v110 = vsel %vm102, %v28, 0
  %v113 = vsel %vm102, %v29, 0
  %v116 = vsel %vm102, %v30, 0
  %v119 = vsel %vm102, %v31, 0
  %v122 = vsel %vm102, %v32, 0
  %v125 = vsel %vm102, %v33, 0
  %v128 = vsel %vm102, %v34, 0
  %v131 = vsel %vm102, %v35, 0
  %v134 = vsel %vm102, %v36, 0
  %v137 = vsel %vm102, %v37, 0
  %v140 = vsel %vm102, %v38, 0
  %v143 = vsel %vm102, %v39, 0
  %v146 = vsel %vm102, %v40, 0
  %v149 = vsel %vm102, %v41, 0
  %v152 = vsel %vm102, %v42, 0
  %v155 = vsel %vm102, %v43, 0
  %v158 = vsel %vm102, %v44, 0
  %v161 = vsel %vm102, %v45, 0
  %v164 = vsel %vm102, %v46, 0
  %v167 = vsel %vm102, %v47, 0
  %v170 = vsel %vm102, %v48, 0
  %v173 = vsel %vm102, %v49, 0
  %v176 = vsel %vm102, %v50, 0
  %v179 = vsel %vm102, %v51, 0
  %v182 = vsel %vm102, %v52, 0
  %v185 = vsel %vm102, %v53, 0
  %v188 = vsel %vm102, %v54, 0
  %v191 = vsel %vm102, %v55, 0
  %v194 = vsel %vm102, %v56, 0
  %v197 = vsel %vm102, %v57, 0
  %v200 = vsel %vm102, %v58, 0
  %v203 = vsel %vm102, %v59, 0
  %v206 = vsel %vm102, %v60, 0
  %v209 = vsel %vm102, %v61, 0
  %v212 = vsel %vm102, %v62, 0
  %v215 = vsel %vm102, %v63, 0
  %v218 = vsel %vm102, %v64, 0
  %v221 = vsel %vm102, %v65, 0
  %v224 = vsel %vm102, %v66, 0
  %v227 = vsel %vm102, %v67, 0
  %v230 = vsel %vm102, %v68, 0
  %v233 = vsel %vm102, %v69, 0
  %v236 = vsel %vm102, %v70, 0
  %v239 = vsel %vm102, %v71, 0
  %v242 = vsel %vm102, %v72, 0
  %v245 = vsel %vm102, %v73, 0
  %v248 = vsel %vm102, %v74, 0
  %v251 = vsel %vm102, %v75, 0
  %v254 = vsel %vm102, %v76, 0
  %v257 = vsel %vm102, %v77, 0
  %v260 = vsel %vm102, %v78, 0
  %v263 = vsel %vm102, %v79, 0
  %v266 = vsel %vm102, %v80, 0
  %v269 = vsel %vm102, %v81, 0
  %v272 = vsel %vm102, %v82, 0
  %v275 = vsel %vm102, %v83, 0
  %v278 = vsel %vm102, %v84, 0
  %v281 = vsel %vm102, %v85, 0
  %v284 = vsel %vm102, %v86, 0
  %v287 = vsel %vm102, %v87, 0
  %v290 = vsel %vm102, %v88, 0
  %v293 = vsel %vm102, %v89, 0
  %vm295 = vcmask 1043456
  %v297 = vsel %vm295, %v94, 0
  %299 = vmatprep.subr.mxu0 0.0
  %300 = vmatpush1.msra.mxu0 0.0
  %301 = vmatprep.subr.mxu0 0.0
  %302 = vmatpush1.msra.mxu0 0.0
  %303 = vmatprep.subr.mxu0 0.0
  %304 = vmatpush1.msra.mxu0 0.0
  %305 = vmatprep.subr.mxu0 0.0
  %306 = vmatpush1.msra.mxu0 0.0
  %307 = vmatprep.subr.mxu0 0.0
  %308 = vmatpush1.msra.mxu0 0.0
  %309 = vmatprep.subr.mxu0 0.0
  %310 = vmatpush1.msra.mxu0 0.0
  %311 = vmatprep.subr.mxu0 0.0
  %312 = vmatpush1.msra.mxu0 0.0
  %313 = vmatprep.subr.mxu0 0.0
  %314 = vmatpush1.msra.mxu0 0.0
  %315 = vmatprep.subr.mxu0 0.0
  %316 = vmatpush1.msra.mxu0 0.0
  %317 = vmatprep.subr.mxu0 0.0
  %318 = vmatpush1.msra.mxu0 0.0
  %319 = vmatprep.subr.mxu0 0.0
  %320 = vmatpush1.msra.mxu0 0.0
  %321 = vmatprep.subr.mxu0 0.0
  %322 = vmatpush1.msra.mxu0 %v297
  %323 = vmatprep.subr.mxu0 0.0
  %324 = vmatpush1.msra.mxu0 %v93
  %325 = vmatprep.subr.mxu0 0.0
  %326 = vmatpush1.msra.mxu0 %v92
  %327 = vmatprep.subr.mxu0 0.0
  %328 = vmatpush1.msra.mxu0 %v91
  %329 = vmatprep.subr.mxu0 0.0
  %330 = vmatpush1.msra.mxu0 %v90
  %331 = vmatprep.subr.mxu0 0.0
  %332 = vmatpush2.msra.mxu0 0.0
  %333 = vmatprep.subr.mxu0 0.0
  %334 = vmatpush2.msra.mxu0 0.0
  %335 = vmatprep.subr.mxu0 0.0
  %336 = vmatpush2.msra.mxu0 0.0
  %337 = vmatprep.subr.mxu0 0.0
  %338 = vmatpush2.msra.mxu0 0.0
  %339 = vmatprep.subr.mxu0 0.0
  %340 = vmatpush2.msra.mxu0 0.0
  %341 = vmatprep.subr.mxu0 0.0
  %342 = vmatpush2.msra.mxu0 0.0
  %343 = vmatprep.subr.mxu0 0.0
  %344 = vmatpush2.msra.mxu0 0.0
  %345 = vmatprep.subr.mxu0 0.0
  %346 = vmatpush2.msra.mxu0 0.0
  %347 = vmatprep.subr.mxu0 0.0
  %348 = vmatpush2.msra.mxu0 0.0
  %349 = vmatprep.subr.mxu0 0.0
  %350 = vmatpush2.msra.mxu0 0.0
  %351 = vmatprep.subr.mxu0 0.0
  %352 = vmatpush2.msra.mxu0 0.0
  %353 = vmatprep.subr.mxu0 0.0
  %354 = vmatpush2.msra.mxu0 0.0
  %355 = vmatprep.subr.mxu0 0.0
  %356 = vmatpush2.msra.mxu0 0.0
  %357 = vmatprep.subr.mxu0 0.0
  %358 = vmatpush2.msra.mxu0 0.0
  %359 = vmatprep.subr.mxu0 0.0
  %360 = vmatpush2.msra.mxu0 0.0
  %361 = vmatprep.subr.mxu0 0.0
  %362 = vmatpush2.msra.mxu0 0.0
  %363 = vmatprep.mubr.f32.mxu0 0.0
  %364 = vmatmul.mubr.f32.gmra.mxu0 %v104
  %v365 = vpop.f32.mrf.mxu0
  %v366 = vadd.f32 %v100, %v365
  %v367 = vpop.f32.mrf.mxu0
  %368 = vmatprep.mubr.f32.mxu0 0.0
  %369 = vmatmul.mubr.f32.gmra.mxu0 %v107
  %v370 = vpop.f32.mrf.mxu0
  %v371 = vadd.f32 %v100, %v370
  %v372 = vpop.f32.mrf.mxu0
  %373 = vmatprep.mubr.f32.mxu0 0.0
  %374 = vmatmul.mubr.f32.gmra.mxu0 %v110
  %v375 = vpop.f32.mrf.mxu0
  %v376 = vadd.f32 %v100, %v375
  %v377 = vpop.f32.mrf.mxu0
  %378 = vmatprep.mubr.f32.mxu0 0.0
  %379 = vmatmul.mubr.f32.gmra.mxu0 %v113
  %v380 = vpop.f32.mrf.mxu0
  %v381 = vadd.f32 %v100, %v380
  %v382 = vpop.f32.mrf.mxu0
  %383 = vmatprep.mubr.f32.mxu0 0.0
  %384 = vmatmul.mubr.f32.gmra.mxu0 %v116
  %v385 = vpop.f32.mrf.mxu0
  %v386 = vadd.f32 %v100, %v385
  %v387 = vpop.f32.mrf.mxu0
  %388 = vmatprep.mubr.f32.mxu0 0.0
  %389 = vmatmul.mubr.f32.gmra.mxu0 %v119
  %v390 = vpop.f32.mrf.mxu0
  %v391 = vadd.f32 %v100, %v390
  %v392 = vpop.f32.mrf.mxu0
  %393 = vmatprep.mubr.f32.mxu0 0.0
  %394 = vmatmul.mubr.f32.gmra.mxu0 %v122
  %v395 = vpop.f32.mrf.mxu0
  %v396 = vadd.f32 %v100, %v395
  %v397 = vpop.f32.mrf.mxu0
  %398 = vmatprep.mubr.f32.mxu0 0.0
  %399 = vmatmul.mubr.f32.gmra.mxu0 %v125
  %v400 = vpop.f32.mrf.mxu0
  %v401 = vadd.f32 %v100, %v400
  %v402 = vpop.f32.mrf.mxu0
  %403 = vmatprep.mubr.f32.mxu0 0.0
  %404 = vmatmul.mubr.f32.gmra.mxu0 %v128
  %v405 = vpop.f32.mrf.mxu0
  %v406 = vadd.f32 %v100, %v405
  %v407 = vpop.f32.mrf.mxu0
  %408 = vmatprep.mubr.f32.mxu0 0.0
  %409 = vmatmul.mubr.f32.gmra.mxu0 %v131
  %v410 = vpop.f32.mrf.mxu0
  %v411 = vadd.f32 %v100, %v410
  %v412 = vpop.f32.mrf.mxu0
  %413 = vmatprep.mubr.f32.mxu0 0.0
  %414 = vmatmul.mubr.f32.gmra.mxu0 %v134
  %v415 = vpop.f32.mrf.mxu0
  %v416 = vadd.f32 %v100, %v415
  %v417 = vpop.f32.mrf.mxu0
  %418 = vmatprep.mubr.f32.mxu0 0.0
  %419 = vmatmul.mubr.f32.gmra.mxu0 %v137
  %v420 = vpop.f32.mrf.mxu0
  %v421 = vadd.f32 %v100, %v420
  %v422 = vpop.f32.mrf.mxu0
  %423 = vmatprep.mubr.f32.mxu0 0.0
  %424 = vmatmul.mubr.f32.gmra.mxu0 %v140
  %v425 = vpop.f32.mrf.mxu0
  %v426 = vadd.f32 %v100, %v425
  %v427 = vpop.f32.mrf.mxu0
  %428 = vmatprep.mubr.f32.mxu0 0.0
  %429 = vmatmul.mubr.f32.gmra.mxu0 %v143
  %v430 = vpop.f32.mrf.mxu0
  %v431 = vadd.f32 %v100, %v430
  %v432 = vpop.f32.mrf.mxu0
  %433 = vmatprep.mubr.f32.mxu0 0.0
  %434 = vmatmul.mubr.f32.gmra.mxu0 %v146
  %v435 = vpop.f32.mrf.mxu0
  %v436 = vadd.f32 %v100, %v435
  %v437 = vpop.f32.mrf.mxu0
  %438 = vmatprep.mubr.f32.mxu0 0.0
  %439 = vmatmul.mubr.f32.gmra.mxu0 %v149
  %v440 = vpop.f32.mrf.mxu0
  %v441 = vadd.f32 %v100, %v440
  %v442 = vpop.f32.mrf.mxu0
  %443 = vmatprep.mubr.f32.mxu0 0.0
  %444 = vmatmul.mubr.f32.gmra.mxu0 %v152
  %v445 = vpop.f32.mrf.mxu0
  %v446 = vadd.f32 %v100, %v445
  %v447 = vpop.f32.mrf.mxu0
  %448 = vmatprep.mubr.f32.mxu0 0.0
  %449 = vmatmul.mubr.f32.gmra.mxu0 %v155
  %v450 = vpop.f32.mrf.mxu0
  %v451 = vadd.f32 %v100, %v450
  %v452 = vpop.f32.mrf.mxu0
  %453 = vmatprep.mubr.f32.mxu0 0.0
  %454 = vmatmul.mubr.f32.gmra.mxu0 %v158
  %v455 = vpop.f32.mrf.mxu0
  %v456 = vadd.f32 %v100, %v455
  %v457 = vpop.f32.mrf.mxu0
  %458 = vmatprep.mubr.f32.mxu0 0.0
  %459 = vmatmul.mubr.f32.gmra.mxu0 %v161
  %v460 = vpop.f32.mrf.mxu0
  %v461 = vadd.f32 %v100, %v460
  %v462 = vpop.f32.mrf.mxu0
  %463 = vmatprep.mubr.f32.mxu0 0.0
  %464 = vmatmul.mubr.f32.gmra.mxu0 %v164
  %v465 = vpop.f32.mrf.mxu0
  %v466 = vadd.f32 %v100, %v465
  %v467 = vpop.f32.mrf.mxu0
  %468 = vmatprep.mubr.f32.mxu0 0.0
  %469 = vmatmul.mubr.f32.gmra.mxu0 %v167
  %v470 = vpop.f32.mrf.mxu0
  %v471 = vadd.f32 %v100, %v470
  %v472 = vpop.f32.mrf.mxu0
  %473 = vmatprep.mubr.f32.mxu0 0.0
  %474 = vmatmul.mubr.f32.gmra.mxu0 %v170
  %v475 = vpop.f32.mrf.mxu0
  %v476 = vadd.f32 %v100, %v475
  %v477 = vpop.f32.mrf.mxu0
  %478 = vmatprep.mubr.f32.mxu0 0.0
  %479 = vmatmul.mubr.f32.gmra.mxu0 %v173
  %v480 = vpop.f32.mrf.mxu0
  %v481 = vadd.f32 %v100, %v480
  %v482 = vpop.f32.mrf.mxu0
  %483 = vmatprep.mubr.f32.mxu0 0.0
  %484 = vmatmul.mubr.f32.gmra.mxu0 %v176
  %v485 = vpop.f32.mrf.mxu0
  %v486 = vadd.f32 %v100, %v485
  %v487 = vpop.f32.mrf.mxu0
  %488 = vmatprep.mubr.f32.mxu0 0.0
  %489 = vmatmul.mubr.f32.gmra.mxu0 %v179
  %v490 = vpop.f32.mrf.mxu0
  %v491 = vadd.f32 %v100, %v490
  %v492 = vpop.f32.mrf.mxu0
  %493 = vmatprep.mubr.f32.mxu0 0.0
  %494 = vmatmul.mubr.f32.gmra.mxu0 %v182
  %v495 = vpop.f32.mrf.mxu0
  %v496 = vadd.f32 %v100, %v495
  %v497 = vpop.f32.mrf.mxu0
  %498 = vmatprep.mubr.f32.mxu0 0.0
  %499 = vmatmul.mubr.f32.gmra.mxu0 %v185
  %v500 = vpop.f32.mrf.mxu0
  %v501 = vadd.f32 %v100, %v500
  %v502 = vpop.f32.mrf.mxu0
  %503 = vmatprep.mubr.f32.mxu0 0.0
  %504 = vmatmul.mubr.f32.gmra.mxu0 %v188
  %v505 = vpop.f32.mrf.mxu0
  %v506 = vadd.f32 %v100, %v505
  %v507 = vpop.f32.mrf.mxu0
  %508 = vmatprep.mubr.f32.mxu0 0.0
  %509 = vmatmul.mubr.f32.gmra.mxu0 %v191
  %v510 = vpop.f32.mrf.mxu0
  %v511 = vadd.f32 %v100, %v510
  %v512 = vpop.f32.mrf.mxu0
  %513 = vmatprep.mubr.f32.mxu0 0.0
  %514 = vmatmul.mubr.f32.gmra.mxu0 %v194
  %v515 = vpop.f32.mrf.mxu0
  %v516 = vadd.f32 %v100, %v515
  %v517 = vpop.f32.mrf.mxu0
  %518 = vmatprep.mubr.f32.mxu0 0.0
  %519 = vmatmul.mubr.f32.gmra.mxu0 %v197
  %v520 = vpop.f32.mrf.mxu0
  %v521 = vadd.f32 %v100, %v520
  %v522 = vpop.f32.mrf.mxu0
  %523 = vmatprep.mubr.f32.mxu0 0.0
  %524 = vmatmul.mubr.f32.gmra.mxu0 %v200
  %v525 = vpop.f32.mrf.mxu0
  %v526 = vadd.f32 %v100, %v525
  %v527 = vpop.f32.mrf.mxu0
  %528 = vmatprep.mubr.f32.mxu0 0.0
  %529 = vmatmul.mubr.f32.gmra.mxu0 %v203
  %v530 = vpop.f32.mrf.mxu0
  %v531 = vadd.f32 %v100, %v530
  %v532 = vpop.f32.mrf.mxu0
  %533 = vmatprep.mubr.f32.mxu0 0.0
  %534 = vmatmul.mubr.f32.gmra.mxu0 %v206
  %v535 = vpop.f32.mrf.mxu0
  %v536 = vadd.f32 %v100, %v535
  %v537 = vpop.f32.mrf.mxu0
  %538 = vmatprep.mubr.f32.mxu0 0.0
  %539 = vmatmul.mubr.f32.gmra.mxu0 %v209
  %v540 = vpop.f32.mrf.mxu0
  %v541 = vadd.f32 %v100, %v540
  %v542 = vpop.f32.mrf.mxu0
  %543 = vmatprep.mubr.f32.mxu0 0.0
  %544 = vmatmul.mubr.f32.gmra.mxu0 %v212
  %v545 = vpop.f32.mrf.mxu0
  %v546 = vadd.f32 %v100, %v545
  %v547 = vpop.f32.mrf.mxu0
  %548 = vmatprep.mubr.f32.mxu0 0.0
  %549 = vmatmul.mubr.f32.gmra.mxu0 %v215
  %v550 = vpop.f32.mrf.mxu0
  %v551 = vadd.f32 %v100, %v550
  %v552 = vpop.f32.mrf.mxu0
  %553 = vmatprep.mubr.f32.mxu0 0.0
  %554 = vmatmul.mubr.f32.gmra.mxu0 %v218
  %v555 = vpop.f32.mrf.mxu0
  %v556 = vadd.f32 %v100, %v555
  %v557 = vpop.f32.mrf.mxu0
  %558 = vmatprep.mubr.f32.mxu0 0.0
  %559 = vmatmul.mubr.f32.gmra.mxu0 %v221
  %v560 = vpop.f32.mrf.mxu0
  %v561 = vadd.f32 %v100, %v560
  %v562 = vpop.f32.mrf.mxu0
  %563 = vmatprep.mubr.f32.mxu0 0.0
  %564 = vmatmul.mubr.f32.gmra.mxu0 %v224
  %v565 = vpop.f32.mrf.mxu0
  %v566 = vadd.f32 %v100, %v565
  %v567 = vpop.f32.mrf.mxu0
  %568 = vmatprep.mubr.f32.mxu0 0.0
  %569 = vmatmul.mubr.f32.gmra.mxu0 %v227
  %v570 = vpop.f32.mrf.mxu0
  %v571 = vadd.f32 %v100, %v570
  %v572 = vpop.f32.mrf.mxu0
  %573 = vmatprep.mubr.f32.mxu0 0.0
  %574 = vmatmul.mubr.f32.gmra.mxu0 %v230
  %v575 = vpop.f32.mrf.mxu0
  %v576 = vadd.f32 %v100, %v575
  %v577 = vpop.f32.mrf.mxu0
  %578 = vmatprep.mubr.f32.mxu0 0.0
  %579 = vmatmul.mubr.f32.gmra.mxu0 %v233
  %v580 = vpop.f32.mrf.mxu0
  %v581 = vadd.f32 %v100, %v580
  %v582 = vpop.f32.mrf.mxu0
  %583 = vmatprep.mubr.f32.mxu0 0.0
  %584 = vmatmul.mubr.f32.gmra.mxu0 %v236
  %v585 = vpop.f32.mrf.mxu0
  %v586 = vadd.f32 %v100, %v585
  %v587 = vpop.f32.mrf.mxu0
  %588 = vmatprep.mubr.f32.mxu0 0.0
  %589 = vmatmul.mubr.f32.gmra.mxu0 %v239
  %v590 = vpop.f32.mrf.mxu0
  %v591 = vadd.f32 %v100, %v590
  %v592 = vpop.f32.mrf.mxu0
  %593 = vmatprep.mubr.f32.mxu0 0.0
  %594 = vmatmul.mubr.f32.gmra.mxu0 %v242
  %v595 = vpop.f32.mrf.mxu0
  %v596 = vadd.f32 %v100, %v595
  %v597 = vpop.f32.mrf.mxu0
  %598 = vmatprep.mubr.f32.mxu0 0.0
  %599 = vmatmul.mubr.f32.gmra.mxu0 %v245
  %v600 = vpop.f32.mrf.mxu0
  %v601 = vadd.f32 %v100, %v600
  %v602 = vpop.f32.mrf.mxu0
  %603 = vmatprep.mubr.f32.mxu0 0.0
  %604 = vmatmul.mubr.f32.gmra.mxu0 %v248
  %v605 = vpop.f32.mrf.mxu0
  %v606 = vadd.f32 %v100, %v605
  %v607 = vpop.f32.mrf.mxu0
  %608 = vmatprep.mubr.f32.mxu0 0.0
  %609 = vmatmul.mubr.f32.gmra.mxu0 %v251
  %v610 = vpop.f32.mrf.mxu0
  %v611 = vadd.f32 %v100, %v610
  %v612 = vpop.f32.mrf.mxu0
  %613 = vmatprep.mubr.f32.mxu0 0.0
  %614 = vmatmul.mubr.f32.gmra.mxu0 %v254
  %v615 = vpop.f32.mrf.mxu0
  %v616 = vadd.f32 %v100, %v615
  %v617 = vpop.f32.mrf.mxu0
  %618 = vmatprep.mubr.f32.mxu0 0.0
  %619 = vmatmul.mubr.f32.gmra.mxu0 %v257
  %v620 = vpop.f32.mrf.mxu0
  %v621 = vadd.f32 %v100, %v620
  %v622 = vpop.f32.mrf.mxu0
  %623 = vmatprep.mubr.f32.mxu0 0.0
  %624 = vmatmul.mubr.f32.gmra.mxu0 %v260
  %v625 = vpop.f32.mrf.mxu0
  %v626 = vadd.f32 %v100, %v625
  %v627 = vpop.f32.mrf.mxu0
  %628 = vmatprep.mubr.f32.mxu0 0.0
  %629 = vmatmul.mubr.f32.gmra.mxu0 %v263
  %v630 = vpop.f32.mrf.mxu0
  %v631 = vadd.f32 %v100, %v630
  %v632 = vpop.f32.mrf.mxu0
  %633 = vmatprep.mubr.f32.mxu0 0.0
  %634 = vmatmul.mubr.f32.gmra.mxu0 %v266
  %v635 = vpop.f32.mrf.mxu0
  %v636 = vadd.f32 %v100, %v635
  %v637 = vpop.f32.mrf.mxu0
  %638 = vmatprep.mubr.f32.mxu0 0.0
  %639 = vmatmul.mubr.f32.gmra.mxu0 %v269
  %v640 = vpop.f32.mrf.mxu0
  %v641 = vadd.f32 %v100, %v640
  %v642 = vpop.f32.mrf.mxu0
  %643 = vmatprep.mubr.f32.mxu0 0.0
  %644 = vmatmul.mubr.f32.gmra.mxu0 %v272
  %v645 = vpop.f32.mrf.mxu0
  %v646 = vadd.f32 %v100, %v645
  %v647 = vpop.f32.mrf.mxu0
  %648 = vmatprep.mubr.f32.mxu0 0.0
  %649 = vmatmul.mubr.f32.gmra.mxu0 %v275
  %v650 = vpop.f32.mrf.mxu0
  %v651 = vadd.f32 %v100, %v650
  %v652 = vpop.f32.mrf.mxu0
  %653 = vmatprep.mubr.f32.mxu0 0.0
  %654 = vmatmul.mubr.f32.gmra.mxu0 %v278
  %v655 = vpop.f32.mrf.mxu0
  %v656 = vadd.f32 %v100, %v655
  %v657 = vpop.f32.mrf.mxu0
  %658 = vmatprep.mubr.f32.mxu0 0.0
  %659 = vmatmul.mubr.f32.gmra.mxu0 %v281
  %v660 = vpop.f32.mrf.mxu0
  %v661 = vadd.f32 %v100, %v660
  %v662 = vpop.f32.mrf.mxu0
  %663 = vmatprep.mubr.f32.mxu0 0.0
  %664 = vmatmul.mubr.f32.gmra.mxu0 %v284
  %v665 = vpop.f32.mrf.mxu0
  %v666 = vadd.f32 %v100, %v665
  %v667 = vpop.f32.mrf.mxu0
  %668 = vmatprep.mubr.f32.mxu0 0.0
  %669 = vmatmul.mubr.f32.gmra.mxu0 %v287
  %v670 = vpop.f32.mrf.mxu0
  %v671 = vadd.f32 %v100, %v670
  %v672 = vpop.f32.mrf.mxu0
  %673 = vmatprep.mubr.f32.mxu0 0.0
  %674 = vmatmul.mubr.f32.gmra.mxu0 %v290
  %v675 = vpop.f32.mrf.mxu0
  %v676 = vadd.f32 %v100, %v675
  %v677 = vpop.f32.mrf.mxu0
  %678 = vmatprep.mubr.f32.mxu0 0.0
  %679 = vmatmul.mubr.f32.gmra.mxu0 %v293
  %v680 = vpop.f32.mrf.mxu0
  %v681 = vadd.f32 %v100, %v680
  %v682 = vpop.f32.mrf.mxu0
  %683 = vdwg.mxu0
  %v684 = vmax.f32 %v366, 0.0
  %v685 = vmax.f32 %v371, 0.0
  %v686 = vmax.f32 %v376, 0.0
  %v687 = vmax.f32 %v381, 0.0
  %v688 = vmax.f32 %v386, 0.0
  %v689 = vmax.f32 %v391, 0.0
  %v690 = vmax.f32 %v396, 0.0
  %v691 = vmax.f32 %v401, 0.0
  %v692 = vmax.f32 %v406, 0.0
  %v693 = vmax.f32 %v411, 0.0
  %v694 = vmax.f32 %v416, 0.0
  %v695 = vmax.f32 %v421, 0.0
  %v696 = vmax.f32 %v426, 0.0
  %v697 = vmax.f32 %v431, 0.0
  %v698 = vmax.f32 %v436, 0.0
  %v699 = vmax.f32 %v441, 0.0
  %v700 = vmax.f32 %v446, 0.0
  %v701 = vmax.f32 %v451, 0.0
  %v702 = vmax.f32 %v456, 0.0
  %v703 = vmax.f32 %v461, 0.0
  %v704 = vmax.f32 %v466, 0.0
  %v705 = vmax.f32 %v471, 0.0
  %v706 = vmax.f32 %v476, 0.0
  %v707 = vmax.f32 %v481, 0.0
  %v708 = vmax.f32 %v486, 0.0
  %v709 = vmax.f32 %v491, 0.0
  %v710 = vmax.f32 %v496, 0.0
  %v711 = vmax.f32 %v501, 0.0
  %v712 = vmax.f32 %v506, 0.0
  %v713 = vmax.f32 %v511, 0.0
  %v714 = vmax.f32 %v516, 0.0
  %v715 = vmax.f32 %v521, 0.0
  %v716 = vmax.f32 %v526, 0.0
  %v717 = vmax.f32 %v531, 0.0
  %v718 = vmax.f32 %v536, 0.0
  %v719 = vmax.f32 %v541, 0.0
  %v720 = vmax.f32 %v546, 0.0
  %v721 = vmax.f32 %v551, 0.0
  %v722 = vmax.f32 %v556, 0.0
  %v723 = vmax.f32 %v561, 0.0
  %v724 = vmax.f32 %v566, 0.0
  %v725 = vmax.f32 %v571, 0.0
  %v726 = vmax.f32 %v576, 0.0
  %v727 = vmax.f32 %v581, 0.0
  %v728 = vmax.f32 %v586, 0.0
  %v729 = vmax.f32 %v591, 0.0
  %v730 = vmax.f32 %v596, 0.0
  %v731 = vmax.f32 %v601, 0.0
  %v732 = vmax.f32 %v606, 0.0
  %v733 = vmax.f32 %v611, 0.0
  %v734 = vmax.f32 %v616, 0.0
  %v735 = vmax.f32 %v621, 0.0
  %v736 = vmax.f32 %v626, 0.0
  %v737 = vmax.f32 %v631, 0.0
  %v738 = vmax.f32 %v636, 0.0
  %v739 = vmax.f32 %v641, 0.0
  %v740 = vmax.f32 %v646, 0.0
  %v741 = vmax.f32 %v651, 0.0
  %v742 = vmax.f32 %v656, 0.0
  %v743 = vmax.f32 %v661, 0.0
  %v744 = vmax.f32 %v666, 0.0
  %v745 = vmax.f32 %v671, 0.0
  %v746 = vmax.f32 %v676, 0.0
  %v747 = vmax.f32 %v681, 0.0
  %v748 = vlaneseq
  %v749 = vshrl.u32 %v748, 7
  %v750 = vlaneseq
  %v751 = vand.u32 %v750, 127
  %v752 = vadd.s32 %v751, 128
  %v753 = vadd.s32 %v751, 256
  %v754 = vadd.s32 %v751, 384
  %v755 = vmul.u32 %v749, 256
  %vm756 = vcmp.ge.s32.totalorder %v751, %v755
  %vm757 = vcmp.ge.s32.totalorder %v752, %v755
  %vm758 = vcmp.ge.s32.totalorder %v753, %v755
  %vm759 = vcmp.ge.s32.totalorder %v754, %v755
  %v760 = vadd.s32 %v749, 1
  %v761 = vmul.u32 %v760, 256
  %vm762 = vcmp.lt.s32.totalorder %v751, %v761
  %vm763 = vcmp.lt.s32.totalorder %v752, %v761
  %vm764 = vcmp.lt.s32.totalorder %v753, %v761
  %vm765 = vcmp.lt.s32.totalorder %v754, %v761
  %vm766 = vmand %vm756, %vm762
  %vm767 = vmand %vm757, %vm763
  %vm768 = vmand %vm758, %vm764
  %vm769 = vmand %vm759, %vm765
  %v770 = vsel %vm766, 0.00390625, 0.0
  %v771 = vsel %vm767, 0.00390625, 0.0
  %v772 = vsel %vm768, 0.00390625, 0.0
  %v773 = vsel %vm769, 0.00390625, 0.0
  %774 = vmatprep.subr.mxu0 0.0
  %775 = vmatpush1.msra.mxu0 %v699
  %776 = vmatprep.subr.mxu0 0.0
  %777 = vmatpush1.msra.mxu0 %v698
  %778 = vmatprep.subr.mxu0 0.0
  %779 = vmatpush1.msra.mxu0 %v697
  %780 = vmatprep.subr.mxu0 0.0
  %781 = vmatpush1.msra.mxu0 %v696
  %782 = vmatprep.subr.mxu0 0.0
  %783 = vmatpush1.msra.mxu0 %v695
  %784 = vmatprep.subr.mxu0 0.0
  %785 = vmatpush1.msra.mxu0 %v694
  %786 = vmatprep.subr.mxu0 0.0
  %787 = vmatpush1.msra.mxu0 %v693
  %788 = vmatprep.subr.mxu0 0.0
  %789 = vmatpush1.msra.mxu0 %v692
  %790 = vmatprep.subr.mxu0 0.0
  %791 = vmatpush1.msra.mxu0 %v691
  %792 = vmatprep.subr.mxu0 0.0
  %793 = vmatpush1.msra.mxu0 %v690
  %794 = vmatprep.subr.mxu0 0.0
  %795 = vmatpush1.msra.mxu0 %v689
  %796 = vmatprep.subr.mxu0 0.0
  %797 = vmatpush1.msra.mxu0 %v688
  %798 = vmatprep.subr.mxu0 0.0
  %799 = vmatpush1.msra.mxu0 %v687
  %800 = vmatprep.subr.mxu0 0.0
  %801 = vmatpush1.msra.mxu0 %v686
  %802 = vmatprep.subr.mxu0 0.0
  %803 = vmatpush1.msra.mxu0 %v685
  %804 = vmatprep.subr.mxu0 0.0
  %805 = vmatpush1.msra.mxu0 %v684
  %806 = vmatprep.subr.mxu0 0.0
  %807 = vmatpush2.msra.mxu0 %v715
  %808 = vmatprep.subr.mxu0 0.0
  %809 = vmatpush2.msra.mxu0 %v714
  %810 = vmatprep.subr.mxu0 0.0
  %811 = vmatpush2.msra.mxu0 %v713
  %812 = vmatprep.subr.mxu0 0.0
  %813 = vmatpush2.msra.mxu0 %v712
  %814 = vmatprep.subr.mxu0 0.0
  %815 = vmatpush2.msra.mxu0 %v711
  %816 = vmatprep.subr.mxu0 0.0
  %817 = vmatpush2.msra.mxu0 %v710
  %818 = vmatprep.subr.mxu0 0.0
  %819 = vmatpush2.msra.mxu0 %v709
  %820 = vmatprep.subr.mxu0 0.0
  %821 = vmatpush2.msra.mxu0 %v708
  %822 = vmatprep.subr.mxu0 0.0
  %823 = vmatpush2.msra.mxu0 %v707
  %824 = vmatprep.subr.mxu0 0.0
  %825 = vmatpush2.msra.mxu0 %v706
  %826 = vmatprep.subr.mxu0 0.0
  %827 = vmatpush2.msra.mxu0 %v705
  %828 = vmatprep.subr.mxu0 0.0
  %829 = vmatpush2.msra.mxu0 %v704
  %830 = vmatprep.subr.mxu0 0.0
  %831 = vmatpush2.msra.mxu0 %v703
  %832 = vmatprep.subr.mxu0 0.0
  %833 = vmatpush2.msra.mxu0 %v702
  %834 = vmatprep.subr.mxu0 0.0
  %835 = vmatpush2.msra.mxu0 %v701
  %836 = vmatprep.subr.mxu0 0.0
  %837 = vmatpush2.msra.mxu0 %v700
  %838 = vmatprep.mubr.f32.mxu0 %v771
  %839 = vmatmul.mubr.f32.gmra.mxu0 %v770
  %v840 = vpop.f32.mrf.mxu0
  %v841 = vadd.f32 0.0, %v840
  %v842 = vpop.f32.mrf.mxu0
  %843 = vdwg.mxu0
  %844 = vmatprep.subr.mxu0 0.0
  %845 = vmatpush1.msra.mxu0 %v731
  %846 = vmatprep.subr.mxu0 0.0
  %847 = vmatpush1.msra.mxu0 %v730
  %848 = vmatprep.subr.mxu0 0.0
  %849 = vmatpush1.msra.mxu0 %v729
  %850 = vmatprep.subr.mxu0 0.0
  %851 = vmatpush1.msra.mxu0 %v728
  %852 = vmatprep.subr.mxu0 0.0
  %853 = vmatpush1.msra.mxu0 %v727
  %854 = vmatprep.subr.mxu0 0.0
  %855 = vmatpush1.msra.mxu0 %v726
  %856 = vmatprep.subr.mxu0 0.0
  %857 = vmatpush1.msra.mxu0 %v725
  %858 = vmatprep.subr.mxu0 0.0
  %859 = vmatpush1.msra.mxu0 %v724
  %860 = vmatprep.subr.mxu0 0.0
  %861 = vmatpush1.msra.mxu0 %v723
  %862 = vmatprep.subr.mxu0 0.0
  %863 = vmatpush1.msra.mxu0 %v722
  %864 = vmatprep.subr.mxu0 0.0
  %865 = vmatpush1.msra.mxu0 %v721
  %866 = vmatprep.subr.mxu0 0.0
  %867 = vmatpush1.msra.mxu0 %v720
  %868 = vmatprep.subr.mxu0 0.0
  %869 = vmatpush1.msra.mxu0 %v719
  %870 = vmatprep.subr.mxu0 0.0
  %871 = vmatpush1.msra.mxu0 %v718
  %872 = vmatprep.subr.mxu0 0.0
  %873 = vmatpush1.msra.mxu0 %v717
  %874 = vmatprep.subr.mxu0 0.0
  %875 = vmatpush1.msra.mxu0 %v716
  %876 = vmatprep.subr.mxu0 0.0
  %877 = vmatpush2.msra.mxu0 %v747
  %878 = vmatprep.subr.mxu0 0.0
  %879 = vmatpush2.msra.mxu0 %v746
  %880 = vmatprep.subr.mxu0 0.0
  %881 = vmatpush2.msra.mxu0 %v745
  %882 = vmatprep.subr.mxu0 0.0
  %883 = vmatpush2.msra.mxu0 %v744
  %884 = vmatprep.subr.mxu0 0.0
  %885 = vmatpush2.msra.mxu0 %v743
  %886 = vmatprep.subr.mxu0 0.0
  %887 = vmatpush2.msra.mxu0 %v742
  %888 = vmatprep.subr.mxu0 0.0
  %889 = vmatpush2.msra.mxu0 %v741
  %890 = vmatprep.subr.mxu0 0.0
  %891 = vmatpush2.msra.mxu0 %v740
  %892 = vmatprep.subr.mxu0 0.0
  %893 = vmatpush2.msra.mxu0 %v739
  %894 = vmatprep.subr.mxu0 0.0
  %895 = vmatpush2.msra.mxu0 %v738
  %896 = vmatprep.subr.mxu0 0.0
  %897 = vmatpush2.msra.mxu0 %v737
  %898 = vmatprep.subr.mxu0 0.0
  %899 = vmatpush2.msra.mxu0 %v736
  %900 = vmatprep.subr.mxu0 0.0
  %901 = vmatpush2.msra.mxu0 %v735
  %902 = vmatprep.subr.mxu0 0.0
  %903 = vmatpush2.msra.mxu0 %v734
  %904 = vmatprep.subr.mxu0 0.0
  %905 = vmatpush2.msra.mxu0 %v733
  %906 = vmatprep.subr.mxu0 0.0
  %907 = vmatpush2.msra.mxu0 %v732
  %908 = vmatprep.mubr.f32.mxu0 %v773
  %909 = vmatmul.mubr.f32.gmra.mxu0 %v772
  %v910 = vpop.f32.mrf.mxu0
  %v911 = vadd.f32 %v841, %v910
  %v912 = vpop.f32.mrf.mxu0
  %913 = vdwg.mxu0
  %v914 = vld [vmem:[%s3] sm:$0xff]
  %v915 = vld [vmem:[%s3 + $0x8] sm:$0xff]
  %v916 = vld [vmem:[%s4] sm:$0x1]
  %v918 = vlaneseq
  %v919 = vshrl.u32 %v918, 7
  %v920 = vsub.s32 0, %v919
  %v921 = vrot.slane %v916, %v920
  %vm923 = vcmask 130048
  %v925 = vsel %vm923, %v911, 0
  %927 = vmatprep.subr.mxu0 0.0
  %928 = vmatpush1.msra.mxu0 0.0
  %929 = vmatprep.subr.mxu0 0.0
  %930 = vmatpush1.msra.mxu0 0.0
  %931 = vmatprep.subr.mxu0 0.0
  %932 = vmatpush1.msra.mxu0 0.0
  %933 = vmatprep.subr.mxu0 0.0
  %934 = vmatpush1.msra.mxu0 0.0
  %935 = vmatprep.subr.mxu0 0.0
  %936 = vmatpush1.msra.mxu0 0.0
  %937 = vmatprep.subr.mxu0 0.0
  %938 = vmatpush1.msra.mxu0 0.0
  %939 = vmatprep.subr.mxu0 0.0
  %940 = vmatpush1.msra.mxu0 0.0
  %941 = vmatprep.subr.mxu0 0.0
  %942 = vmatpush1.msra.mxu0 0.0
  %943 = vmatprep.subr.mxu0 0.0
  %944 = vmatpush1.msra.mxu0 0.0
  %945 = vmatprep.subr.mxu0 0.0
  %946 = vmatpush1.msra.mxu0 0.0
  %947 = vmatprep.subr.mxu0 0.0
  %948 = vmatpush1.msra.mxu0 0.0
  %949 = vmatprep.subr.mxu0 0.0
  %950 = vmatpush1.msra.mxu0 0.0
  %951 = vmatprep.subr.mxu0 0.0
  %952 = vmatpush1.msra.mxu0 0.0
  %953 = vmatprep.subr.mxu0 0.0
  %954 = vmatpush1.msra.mxu0 0.0
  %955 = vmatprep.subr.mxu0 0.0
  %956 = vmatpush1.msra.mxu0 %v915
  %957 = vmatprep.subr.mxu0 0.0
  %958 = vmatpush1.msra.mxu0 %v914
  %959 = vmatprep.subr.mxu0 0.0
  %960 = vmatpush2.msra.mxu0 0.0
  %961 = vmatprep.subr.mxu0 0.0
  %962 = vmatpush2.msra.mxu0 0.0
  %963 = vmatprep.subr.mxu0 0.0
  %964 = vmatpush2.msra.mxu0 0.0
  %965 = vmatprep.subr.mxu0 0.0
  %966 = vmatpush2.msra.mxu0 0.0
  %967 = vmatprep.subr.mxu0 0.0
  %968 = vmatpush2.msra.mxu0 0.0
  %969 = vmatprep.subr.mxu0 0.0
  %970 = vmatpush2.msra.mxu0 0.0
  %971 = vmatprep.subr.mxu0 0.0
  %972 = vmatpush2.msra.mxu0 0.0
  %973 = vmatprep.subr.mxu0 0.0
  %974 = vmatpush2.msra.mxu0 0.0
  %975 = vmatprep.subr.mxu0 0.0
  %976 = vmatpush2.msra.mxu0 0.0
  %977 = vmatprep.subr.mxu0 0.0
  %978 = vmatpush2.msra.mxu0 0.0
  %979 = vmatprep.subr.mxu0 0.0
  %980 = vmatpush2.msra.mxu0 0.0
  %981 = vmatprep.subr.mxu0 0.0
  %982 = vmatpush2.msra.mxu0 0.0
  %983 = vmatprep.subr.mxu0 0.0
  %984 = vmatpush2.msra.mxu0 0.0
  %985 = vmatprep.subr.mxu0 0.0
  %986 = vmatpush2.msra.mxu0 0.0
  %987 = vmatprep.subr.mxu0 0.0
  %988 = vmatpush2.msra.mxu0 0.0
  %989 = vmatprep.subr.mxu0 0.0
  %990 = vmatpush2.msra.mxu0 0.0
  %991 = vmatprep.mubr.f32.mxu0 0.0
  %992 = vmatmul.mubr.f32.gmra.mxu0 %v925
  %v993 = vpop.f32.mrf.mxu0
  %v994 = vadd.f32 %v921, %v993
  %v995 = vpop.f32.mrf.mxu0
  %996 = vdwg.mxu0
  %v997 = vmax.f32 %v994, 0.0
  %v998 = vld [vmem:[%s5] sm:$0xff]
  %v999 = vld [vmem:[%s5 + $0x8] sm:$0xff]
  %v1000 = vld [vmem:[%s5 + $0x10] sm:$0xff]
  %v1001 = vld [vmem:[%s5 + $0x18] sm:$0xff]
  %v1002 = vld [vmem:[%s5 + $0x20] sm:$0xff]
  %v1003 = vld [vmem:[%s5 + $0x28] sm:$0xff]
  %v1004 = vld [vmem:[%s5 + $0x30] sm:$0xff]
  %v1005 = vld [vmem:[%s5 + $0x38] sm:$0xff]
  %v1006 = vld [vmem:[%s5 + $0x40] sm:$0xff]
  %v1007 = vld [vmem:[%s5 + $0x48] sm:$0xff]
  %v1008 = vld [vmem:[%s5 + $0x50] sm:$0xff]
  %v1009 = vld [vmem:[%s5 + $0x58] sm:$0xff]
  %v1010 = vld [vmem:[%s6] sm:$0x7]
  %v1012 = vlaneseq
  %v1013 = vshrl.u32 %v1012, 7
  %v1014 = vsub.s32 0, %v1013
  %v1015 = vrot.slane %v1010, %v1014
  %v1016 = vlaneseq
  %v1017 = vshrl.u32 %v1016, 7
  %v1018 = vsub.s32 1, %v1017
  %v1019 = vrot.slane %v1010, %v1018
  %v1020 = vlaneseq
  %v1021 = vshrl.u32 %v1020, 7
  %v1022 = vsub.s32 2, %v1021
  %v1023 = vrot.slane %v1010, %v1022
  %vm1027 = vcmask 261120
  %v1029 = vsel %vm1027, %v997, 0
  %1031 = vmatprep.subr.mxu0 0.0
  %1032 = vmatpush1.msra.mxu0 0.0
  %1033 = vmatprep.subr.mxu0 0.0
  %1034 = vmatpush1.msra.mxu0 0.0
  %1035 = vmatprep.subr.mxu0 0.0
  %1036 = vmatpush1.msra.mxu0 0.0
  %1037 = vmatprep.subr.mxu0 0.0
  %1038 = vmatpush1.msra.mxu0 0.0
  %1039 = vmatprep.subr.mxu0 0.0
  %1040 = vmatpush1.msra.mxu0 0.0
  %1041 = vmatprep.subr.mxu0 0.0
  %1042 = vmatpush1.msra.mxu0 0.0
  %1043 = vmatprep.subr.mxu0 0.0
  %1044 = vmatpush1.msra.mxu0 0.0
  %1045 = vmatprep.subr.mxu0 0.0
  %1046 = vmatpush1.msra.mxu0 0.0
  %1047 = vmatprep.subr.mxu0 0.0
  %1048 = vmatpush1.msra.mxu0 0.0
  %1049 = vmatprep.subr.mxu0 0.0
  %1050 = vmatpush1.msra.mxu0 0.0
  %1051 = vmatprep.subr.mxu0 0.0
  %1052 = vmatpush1.msra.mxu0 0.0
  %1053 = vmatprep.subr.mxu0 0.0
  %1054 = vmatpush1.msra.mxu0 0.0
  %1055 = vmatprep.subr.mxu0 %v1008
  %1056 = vmatpush1.msra.mxu0 %v1007
  %1057 = vmatprep.subr.mxu0 %v1005
  %1058 = vmatpush1.msra.mxu0 %v1004
  %1059 = vmatprep.subr.mxu0 %v1002
  %1060 = vmatpush1.msra.mxu0 %v1001
  %1061 = vmatprep.subr.mxu0 %v999
  %1062 = vmatpush1.msra.mxu0 %v998
  %1063 = vmatprep.subr.mxu0 0.0
  %1064 = vmatpush2.msra.mxu0 0.0
  %1065 = vmatprep.subr.mxu0 0.0
  %1066 = vmatpush2.msra.mxu0 0.0
  %1067 = vmatprep.subr.mxu0 0.0
  %1068 = vmatpush2.msra.mxu0 0.0
  %1069 = vmatprep.subr.mxu0 0.0
  %1070 = vmatpush2.msra.mxu0 0.0
  %1071 = vmatprep.subr.mxu0 0.0
  %1072 = vmatpush2.msra.mxu0 0.0
  %1073 = vmatprep.subr.mxu0 0.0
  %1074 = vmatpush2.msra.mxu0 0.0
  %1075 = vmatprep.subr.mxu0 0.0
  %1076 = vmatpush2.msra.mxu0 0.0
  %1077 = vmatprep.subr.mxu0 0.0
  %1078 = vmatpush2.msra.mxu0 0.0
  %1079 = vmatprep.subr.mxu0 0.0
  %1080 = vmatpush2.msra.mxu0 0.0
  %1081 = vmatprep.subr.mxu0 0.0
  %1082 = vmatpush2.msra.mxu0 0.0
  %1083 = vmatprep.subr.mxu0 0.0
  %1084 = vmatpush2.msra.mxu0 0.0
  %1085 = vmatprep.subr.mxu0 0.0
  %1086 = vmatpush2.msra.mxu0 0.0
  %1087 = vmatprep.subr.mxu0 0.0
  %1088 = vmatpush2.msra.mxu0 0.0
  %1089 = vmatprep.subr.mxu0 0.0
  %1090 = vmatpush2.msra.mxu0 0.0
  %1091 = vmatprep.subr.mxu0 0.0
  %1092 = vmatpush2.msra.mxu0 0.0
  %1093 = vmatprep.subr.mxu0 0.0
  %1094 = vmatpush2.msra.mxu0 0.0
  %1095 = vmatprep.mubr.f32.mxu0 0.0
  %1096 = vmatmul.mubr.f32.gmra.mxu0 %v1029
  %v1097 = vpop.f32.mrf.mxu0
  %v1098 = vadd.f32 %v1015, %v1097
  %v1099 = vpop.f32.mrf.mxu0
  %v1100 = vadd.f32 %v1019, %v1099
  %1101 = vdwg.mxu0
  %1102 = vmatprep.subr.mxu0 0.0
  %1103 = vmatpush1.msra.mxu0 0.0
  %1104 = vmatprep.subr.mxu0 0.0
  %1105 = vmatpush1.msra.mxu0 0.0
  %1106 = vmatprep.subr.mxu0 0.0
  %1107 = vmatpush1.msra.mxu0 0.0
  %1108 = vmatprep.subr.mxu0 0.0
  %1109 = vmatpush1.msra.mxu0 0.0
  %1110 = vmatprep.subr.mxu0 0.0
  %1111 = vmatpush1.msra.mxu0 0.0
  %1112 = vmatprep.subr.mxu0 0.0
  %1113 = vmatpush1.msra.mxu0 0.0
  %1114 = vmatprep.subr.mxu0 0.0
  %1115 = vmatpush1.msra.mxu0 0.0
  %1116 = vmatprep.subr.mxu0 0.0
  %1117 = vmatpush1.msra.mxu0 0.0
  %1118 = vmatprep.subr.mxu0 0.0
  %1119 = vmatpush1.msra.mxu0 0.0
  %1120 = vmatprep.subr.mxu0 0.0
  %1121 = vmatpush1.msra.mxu0 0.0
  %1122 = vmatprep.subr.mxu0 0.0
  %1123 = vmatpush1.msra.mxu0 0.0
  %1124 = vmatprep.subr.mxu0 0.0
  %1125 = vmatpush1.msra.mxu0 0.0
  %1126 = vmatprep.subr.mxu0 0.0
  %1127 = vmatpush1.msra.mxu0 %v1009
  %1128 = vmatprep.subr.mxu0 0.0
  %1129 = vmatpush1.msra.mxu0 %v1006
  %1130 = vmatprep.subr.mxu0 0.0
  %1131 = vmatpush1.msra.mxu0 %v1003
  %1132 = vmatprep.subr.mxu0 0.0
  %1133 = vmatpush1.msra.mxu0 %v1000
  %1134 = vmatprep.subr.mxu0 0.0
  %1135 = vmatpush2.msra.mxu0 0.0
  %1136 = vmatprep.subr.mxu0 0.0
  %1137 = vmatpush2.msra.mxu0 0.0
  %1138 = vmatprep.subr.mxu0 0.0
  %1139 = vmatpush2.msra.mxu0 0.0
  %1140 = vmatprep.subr.mxu0 0.0
  %1141 = vmatpush2.msra.mxu0 0.0
  %1142 = vmatprep.subr.mxu0 0.0
  %1143 = vmatpush2.msra.mxu0 0.0
  %1144 = vmatprep.subr.mxu0 0.0
  %1145 = vmatpush2.msra.mxu0 0.0
  %1146 = vmatprep.subr.mxu0 0.0
  %1147 = vmatpush2.msra.mxu0 0.0
  %1148 = vmatprep.subr.mxu0 0.0
  %1149 = vmatpush2.msra.mxu0 0.0
  %1150 = vmatprep.subr.mxu0 0.0
  %1151 = vmatpush2.msra.mxu0 0.0
  %1152 = vmatprep.subr.mxu0 0.0
  %1153 = vmatpush2.msra.mxu0 0.0
  %1154 = vmatprep.subr.mxu0 0.0
  %1155 = vmatpush2.msra.mxu0 0.0
  %1156 = vmatprep.subr.mxu0 0.0
  %1157 = vmatpush2.msra.mxu0 0.0
  %1158 = vmatprep.subr.mxu0 0.0
  %1159 = vmatpush2.msra.mxu0 0.0
  %1160 = vmatprep.subr.mxu0 0.0
  %1161 = vmatpush2.msra.mxu0 0.0
  %1162 = vmatprep.subr.mxu0 0.0
  %1163 = vmatpush2.msra.mxu0 0.0
  %1164 = vmatprep.subr.mxu0 0.0
  %1165 = vmatpush2.msra.mxu0 0.0
  %1166 = vmatprep.mubr.f32.mxu0 0.0
  %1167 = vmatmul.mubr.f32.gmra.mxu0 %v1029
  %v1168 = vpop.f32.mrf.mxu0
  %v1169 = vadd.f32 %v1023, %v1168
  %v1170 = vpop.f32.mrf.mxu0
  %1171 = vdwg.mxu0
  %vm1172 = vcmp.lt.s32.totalorder %v751, 3
  %vm1173 = vcmp.lt.s32.totalorder %v752, 3
  %vm1174 = vcmp.lt.s32.totalorder %v753, 3
  %v1175 = vxor.u32 %v1098, 2147483648
  %v1176 = vxor.u32 %v1100, 2147483648
  %v1177 = vxor.u32 %v1169, 2147483648
  %v1178 = vmul.f32 %v1175, 1.442695
  %v1179 = vpow.pop %v1178
  %v1180 = vmul.f32 %v1176, 1.442695
  %v1181 = vpow.pop %v1180
  %v1182 = vmul.f32 %v1177, 1.442695
  %v1183 = vpow.pop %v1182
  %v1184 = vadd.f32 %v1179, 1.0
  %v1185 = vadd.f32 %v1181, 1.0
  %v1186 = vadd.f32 %v1183, 1.0
  %v1187 = vrcp.pop %v1184
  %v1188 = vmul.f32 1.0, %v1187
  %v1189 = vrcp.pop %v1185
  %v1190 = vmul.f32 1.0, %v1189
  %v1191 = vrcp.pop %v1186
  %v1192 = vmul.f32 1.0, %v1191
  %v1193 = vsel %vm1172, %v1098, %v1188
  %v1194 = vsel %vm1173, %v1100, %v1190
  %v1195 = vsel %vm1174, %v1169, %v1192
  %v1199 = vcombine.low %v1193, %v1194
  %v1201 = vunpack.c.l.s4 1983009808
  %v1202 = vunpack.c.0.s8 %v1201
  %v1203 = vlaneseq
  %v1204 = vshrl.u32 %v1203, 7
  %v1205 = vsub.s32 %v1202, %v1204
  %v1206 = vrot.slane %v1199, %v1205
  %v1208 = vunpack.c.l.s4 1983009808
  %v1209 = vunpack.c.0.s8 %v1208
  %v1210 = vlaneseq
  %v1211 = vshrl.u32 %v1210, 7
  %v1212 = vsub.s32 %v1209, %v1211
  %v1213 = vrot.slane %v1195, %v1212
  %v1214 = vcombine.low %v1206, %v1213
  %1216 = vst [vmem:[%s7] sm:$0x3f] %v1214
  // Predicated region
  $region30: #{d_gen_forward.1} parent=0 // pred_check
    _
  $region31: #{d_gen_forward.1} parent=0 // pred_check_branch
    %1218 = sbr.rel (0) target = $region33
  $region32: #{d_gen_forward.1} parent=0 // pred_region
    _
  $region33: #{d_gen_forward.1} parent=0 // pred_fallthru
    _
  // Predicated region
  $region34: #{d_gen_forward.1} parent=0 // pred_check
    _
  $region35: #{d_gen_forward.1} parent=0 // pred_check_branch
    %1220 = sbr.rel (0) target = $region37
  $region36: #{d_gen_forward.1} parent=0 // pred_region
    _
  $region37: #{d_gen_forward.1} parent=0 // pred_fallthru
    _

</llo_original>
